<compile_context>
chip_gen: v5e
topology: v5e:2x2
jax: 0.10.0
libtpu: 0.0.40
codegen_flags: <defaults>
</compile_context>

<pallas_src>
import functools

import jax
import jax.numpy as jnp
from jax.experimental import pallas as pl
from jax.experimental.pallas import tpu as pltpu


def _round_up(x, m):
    return (x + m - 1) // m * m


def _pick_tile_and_pad(n, cap, slack=1.1):
    """Pick a tile (multiple of 128, <= cap) and pad n to a multiple of it,
    preferring big tiles but never paying more than ~slack x the minimum pad."""
    n_align = _round_up(n, 128)
    cands = list(range(128, min(cap, n_align) + 1, 128))
    pads = {t: _round_up(n, t) for t in cands}
    best = min(pads.values())
    allowed = max(best, int(best * slack))
    tile = max(t for t in cands if pads[t] <= allowed)
    return pads[tile], tile


def _largest_divisor_tile(n_pad, cap):
    t = min(cap, n_pad)
    t -= t % 128
    while t >= 128 and n_pad % t:
        t -= 128
    return max(t, 128)


def _vmem_budget_bytes():
    """~70% of physical VMEM (89 MiB on v5e/v6e, ~45 MiB on v7x)."""
    try:
        phys = pltpu.get_tpu_info().vmem_capacity_bytes
    except Exception:
        phys = 64 * 1024 * 1024  # conservative (v7x physical VMEM)
    return min(int(phys * 0.7), 100 * 1024 * 1024)


# ----------------------------------------------------------------------------
# Pallas kernels
# ----------------------------------------------------------------------------
def _layer_kernel(a_ref, x_ref, acc_in_ref, x_out_ref, acc_out_ref, *,
                  tk, x_resident):
    """One LightGCN layer row tile:  x_out[i,:] = sum_k A[i,k] @ X[k,:]
    accumulated in f32 directly into the resident output block; the multi-scale
    running sum is fused into the final k step (acc_out = acc_in + x_out)."""
    k = pl.program_id(1)

    @pl.when(k == 0)
    def _():
        x_out_ref[...] = jnp.zeros_like(x_out_ref)

    if x_resident:
        # X is one VMEM-resident (N_pad, D_pad) block; slice the k-th stripe.
        off = pl.multiple_of(k * tk, 128)
        xk = x_ref[pl.ds(off, tk), :]
    else:
        xk = x_ref[...]

    # Feed the MXU in the adjacency dtype (bf16 x bf16 on the fast path),
    # accumulate in f32.  Casting X touches ~d_pad/tk fewer vregs than A.
    x_out_ref[...] += jnp.dot(a_ref[...], xk.astype(a_ref.dtype),
                              preferred_element_type=jnp.float32)

    @pl.when(k == pl.num_programs(1) - 1)
    def _():
        acc_out_ref[...] = acc_in_ref[...] + x_out_ref[...]


def _score_kernel(src_ref, dst_ref, out_ref):
    """Per-edge dot product + sigmoid.  Inputs (d_eff, tE) with edges on the
    lane axis; reduction over sublanes; fully lane-dense (1, tE) store."""
    s = jnp.sum(src_ref[...] * dst_ref[...], axis=0, keepdims=True)
    out_ref[...] = jax.nn.sigmoid(s)


# ----------------------------------------------------------------------------
# Adjacency construction (hoisted out of the training step)
# ----------------------------------------------------------------------------
def build_norm_adj(edge_index_mp, num_nodes):
    """Dense symmetric-normalized adjacency D^{-1/2} A D^{-1/2} (LightGCN).
    Assumes edge_index_mp is already symmetrized (both directions present)."""
    src = edge_index_mp[0]
    dst = edge_index_mp[1]
    deg = jnp.zeros((num_nodes,), jnp.float32).at[src].add(1.0)
    dinv = jnp.where(deg > 0, 1.0 / jnp.sqrt(deg), 0.0)
    norm = dinv[src] * dinv[dst]
    adj = jnp.zeros((num_nodes, num_nodes), jnp.float32)
    adj = adj.at[dst, src].add(norm)  # message j -> i lands in row i, col j
    return adj


def build_padded_adj(edge_index_mp, num_nodes, adj_dtype=jnp.bfloat16,
                     tile_cap=512):
    """Build the tile-aligned padded adjacency ONCE per graph and reuse it
    across training steps (it only depends on the message-passing edges)."""
    n_pad, _ = _pick_tile_and_pad(num_nodes, tile_cap)
    adj = build_norm_adj(edge_index_mp, num_nodes).astype(adj_dtype)
    return jnp.zeros((n_pad, n_pad), adj_dtype).at[:num_nodes, :num_nodes].set(adj)


# ----------------------------------------------------------------------------
# Propagation
# ----------------------------------------------------------------------------
def _propagation_call(n_pad, d_pad, adj_dtype):
    tk = _largest_divisor_tile(n_pad, 512)
    tm = tk
    # Bigger row tiles amortize per-step overhead; keep >= 2 row tiles when
    # possible so the "parallel" axis can shard across v7x's two TensorCores.
    while n_pad % (2 * tm) == 0 and 2 * tm <= 1024 and n_pad // (2 * tm) >= 2:
        tm *= 2

    budget = _vmem_budget_bytes()
    adj_bytes = jnp.dtype(adj_dtype).itemsize
    resident_need = (2 * n_pad * d_pad * 4          # X (assume double-buffered)
                     + 2 * tm * tk * adj_bytes      # A tile, double-buffered
                     + 3 * 2 * tm * d_pad * 4       # acc_in / x_out / acc_out
                     + (2 << 20))                   # headroom
    x_resident = resident_need <= budget

    if x_resident:
        # X fetched once per layer, stays resident across the whole grid.
        x_spec = pl.BlockSpec((n_pad, d_pad), lambda i, k: (0, 0))
    else:
        # Fallback for very large graphs: stream (tk, d_pad) stripes of X.
        x_spec = pl.BlockSpec((tk, d_pad), lambda i, k: (k, 0))

    kernel = functools.partial(_layer_kernel, tk=tk, x_resident=x_resident)
    grid = (n_pad // tm, n_pad // tk)

    return pl.pallas_call(
        kernel,
        out_shape=(jax.ShapeDtypeStruct((n_pad, d_pad), jnp.float32),
                   jax.ShapeDtypeStruct((n_pad, d_pad), jnp.float32)),
        grid_spec=pltpu.PrefetchScalarGridSpec(
            num_scalar_prefetch=0,
            grid=grid,
            in_specs=[
                pl.BlockSpec((tm, tk), lambda i, k: (i, k)),      # A tile
                x_spec,                                           # X
                pl.BlockSpec((tm, d_pad), lambda i, k: (i, 0)),   # running acc
            ],
            out_specs=(
                pl.BlockSpec((tm, d_pad), lambda i, k: (i, 0)),   # x_new
                pl.BlockSpec((tm, d_pad), lambda i, k: (i, 0)),   # acc_new
            ),
        ),
        # Reuse the running-acc buffer across layers (no extra HBM slab).
        input_output_aliases={2: 1},
        compiler_params=pltpu.CompilerParams(
            dimension_semantics=("parallel", "arbitrary"),
            vmem_limit_bytes=budget,
        ),
    )


def _gnn_propagation_padded(adj_pad, embeddings, num_layers):
    """Returns padded (N_pad, D_pad) multi-scale embeddings (zero padded)."""
    n, d = embeddings.shape
    n_pad = adj_pad.shape[0]
    d_pad = _round_up(d, 128)

    x0 = jnp.zeros((n_pad, d_pad), jnp.float32).at[:n, :d].set(
        embeddings.astype(jnp.float32))

    layer = _propagation_call(n_pad, d_pad, adj_pad.dtype)

    x = x0
    acc = jnp.zeros((n_pad, d_pad), jnp.float32)   # sum of layer outputs 1..L
    for _ in range(num_layers):
        x, acc = layer(adj_pad, x, acc)
    return (x0 + acc) / jnp.float32(num_layers + 1)


def gnn_propagation(embeddings, edge_index_mp, num_layers,
                    adj_dtype=jnp.bfloat16):
    n, d = embeddings.shape
    adj_pad = build_padded_adj(edge_index_mp, n, adj_dtype)
    return _gnn_propagation_padded(adj_pad, embeddings, num_layers)[:n, :d]


# ----------------------------------------------------------------------------
# Edge scoring
# ----------------------------------------------------------------------------
def predict_scores(edge_index, final_pad, emb_dim):
    """sigmoid(<emb[src], emb[dst]>) per edge, lane-dense score layout."""
    e = edge_index.shape[1]
    d_eff = _round_up(emb_dim, 8)          # only stream the real width
    e_pad, te = _pick_tile_and_pad(max(e, 1), 2048)

    # TODO(synk): for very large E, fuse this gather into the kernel via
    # scalar-prefetched edge indices instead of an XLA gather of (E_pad, d_eff).
    src_idx = jnp.zeros((e_pad,), jnp.int32).at[:e].set(edge_index[0])
    dst_idx = jnp.zeros((e_pad,), jnp.int32).at[:e].set(edge_index[1])
    emb = final_pad[:, :d_eff]
    src_t = emb[src_idx, :].T              # (d_eff, E_pad), edges on lanes
    dst_t = emb[dst_idx, :].T

    grid = (e_pad // te,)
    out = pl.pallas_call(
        _score_kernel,
        out_shape=jax.ShapeDtypeStruct((1, e_pad), jnp.float32),
        grid_spec=pltpu.PrefetchScalarGridSpec(
            num_scalar_prefetch=0,
            grid=grid,
            in_specs=[
                pl.BlockSpec((d_eff, te), lambda i: (0, i)),
                pl.BlockSpec((d_eff, te), lambda i: (0, i)),
            ],
            out_specs=pl.BlockSpec((1, te), lambda i: (0, i)),
        ),
        compiler_params=pltpu.CompilerParams(
            dimension_semantics=("parallel",),
        ),
    )(src_t, dst_t)
    return out[0, :e]


# ----------------------------------------------------------------------------
# BPR loss (adjacency is prebuilt & hoisted out of this jitted step)
# ----------------------------------------------------------------------------
def _bpr_loss_impl(embeddings, adj_pad, pos_edge_index, neg_edge_index,
                   num_layers):
    n, d = embeddings.shape
    final_pad = _gnn_propagation_padded(adj_pad, embeddings, num_layers)
    pos_scores = predict_scores(pos_edge_index, final_pad, d)
    neg_scores = predict_scores(neg_edge_index, final_pad, d)
    # Matches the PyTorch module: scores are already sigmoided in
    # predict_scores, then sigmoid is applied again on (pos - neg).
    loss = -jnp.mean(jnp.log(jax.nn.sigmoid(pos_scores - neg_scores)))
    return loss, final_pad[:n, :d]


bpr_loss = jax.jit(_bpr_loss_impl, static_argnames=("num_layers",))


# ----------------------------------------------------------------------------
# Pure-JAX reference (same quantization choices as the kernel)
# ----------------------------------------------------------------------------
def _reference(embeddings, edge_index_mp, pos_edge_index, neg_edge_index,
               num_layers, adj_dtype):
    adj = build_norm_adj(edge_index_mp, embeddings.shape[0]).astype(adj_dtype)
    x = embeddings.astype(jnp.float32)
    layers = [x]
    for _ in range(num_layers):
        x = jnp.dot(adj, x.astype(adj_dtype),
                    preferred_element_type=jnp.float32)
        layers.append(x)
    final = jnp.stack(layers, axis=0).mean(axis=0)

    def scores(ei):
        return jax.nn.sigmoid(
            jnp.sum(final[ei[0, :], :] * final[ei[1, :], :], axis=1))

    pos = scores(pos_edge_index)
    neg = scores(neg_edge_index)
    loss = -jnp.mean(jnp.log(jax.nn.sigmoid(pos - neg)))
    return loss, final


# ----------------------------------------------------------------------------
# Main
# ----------------------------------------------------------------------------
if __name__ == "__main__":
    emb_dim = 32
    num_playlists = 24
    num_songs = 40
    num_nodes = num_playlists + num_songs  # 64
    num_layers = 3
    num_mp_edges = 96
    num_eval_edges = 16

    key = jax.random.PRNGKey(0)
    k_emb, k_src, k_dst, k_pos_p, k_pos_s, k_neg_p, k_neg_s = jax.random.split(key, 7)

    # nn.init.normal_(std=0.1) equivalent, deterministic
    embeddings = 0.1 * jax.random.normal(k_emb, (num_nodes, emb_dim), jnp.float32)

    # bipartite playlist->song message-passing edges, symmetrized (undirected)
    mp_src = jax.random.randint(k_src, (num_mp_edges,), 0, num_playlists)
    mp_dst = jax.random.randint(k_dst, (num_mp_edges,), num_playlists, num_nodes)
    edge_index_mp = jnp.stack(
        [jnp.concatenate([mp_src, mp_dst]), jnp.concatenate([mp_dst, mp_src])], axis=0
    ).astype(jnp.int32)

    pos_edge_index = jnp.stack(
        [jax.random.randint(k_pos_p, (num_eval_edges,), 0, num_playlists),
         jax.random.randint(k_pos_s, (num_eval_edges,), num_playlists, num_nodes)],
        axis=0).astype(jnp.int32)
    neg_edge_index = jnp.stack(
        [jax.random.randint(k_neg_p, (num_eval_edges,), 0, num_playlists),
         jax.random.randint(k_neg_s, (num_eval_edges,), num_playlists, num_nodes)],
        axis=0).astype(jnp.int32)

    # Adjacency built ONCE per graph (hoisted out of the jitted loss).
    adj_pad_f32 = build_padded_adj(edge_index_mp, num_nodes, jnp.float32)
    adj_pad_bf16 = build_padded_adj(edge_index_mp, num_nodes, jnp.bfloat16)

    # 1) Exact f32 semantics (matches the PyTorch module numerics).
    loss32, final32 = bpr_loss(embeddings, adj_pad_f32, pos_edge_index,
                               neg_edge_index, num_layers=num_layers)
    jax.block_until_ready((loss32, final32))
    ref_loss32, ref_final32 = _reference(embeddings, edge_index_mp, pos_edge_index,
                                         neg_edge_index, num_layers, jnp.float32)
    assert jnp.allclose(final32, ref_final32, atol=1e-5, rtol=1e-5)
    assert jnp.allclose(loss32, ref_loss32, atol=1e-5, rtol=1e-5)

    # 2) Perf config: bf16 adjacency fed straight to the MXU (bf16 x bf16,
    #    f32 accumulate).  Compared against a reference using the same
    #    bf16 quantization so the check stays tight.
    loss_bf, final_bf = bpr_loss(embeddings, adj_pad_bf16, pos_edge_index,
                                 neg_edge_index, num_layers=num_layers)
    jax.block_until_ready((loss_bf, final_bf))
    ref_loss_bf, ref_final_bf = _reference(embeddings, edge_index_mp, pos_edge_index,
                                           neg_edge_index, num_layers, jnp.bfloat16)
    assert jnp.allclose(final_bf, ref_final_bf, atol=1e-4, rtol=1e-4)
    assert jnp.allclose(loss_bf, ref_loss_bf, atol=1e-4, rtol=1e-4)

    # TODO(synk): `evaluation()` needs unique_consecutive + the external
    # `recall()` host-side metric; no clean Pallas equivalent, omitted.
    print("KERNEL_OK")
</pallas_src>

<mosaic_0001>
module attributes {stable_mosaic.version = 11 : i64} {
  func.func @_layer_kernel(%arg0: i32, %arg1: i32, %arg2: memref<128x128xf32, #tpu.memory_space<vmem>>, %arg3: memref<128x128xf32, #tpu.memory_space<vmem>>, %arg4: memref<128x128xf32, #tpu.memory_space<vmem>>, %arg5: memref<128x128xf32, #tpu.memory_space<vmem>>, %arg6: memref<128x128xf32, #tpu.memory_space<vmem>>) attributes {dimension_semantics = [#tpu.dimension_semantics<parallel>, #tpu.dimension_semantics<arbitrary>], iteration_bounds = array<i64: 1, 1>, scalar_prefetch = 0 : i64, scratch_operands = 0 : i64, tpu.core_type = #tpu.core_type<tc>, window_params = [{transform_indices = @transform_0, window_bounds = array<i64: 128, 128>}, {pipeline_mode = #tpu.pipeline_mode<synchronous>, transform_indices = @transform_1, window_bounds = array<i64: 128, 128>}, {transform_indices = @transform_2, window_bounds = array<i64: 128, 128>}, {transform_indices = @transform_3, window_bounds = array<i64: 128, 128>}, {transform_indices = @transform_4, window_bounds = array<i64: 128, 128>}]} {
    %c0_i32 = arith.constant 0 : i32
    %0 = arith.cmpi eq, %arg1, %c0_i32 : i32
    %1 = arith.extui %0 : i1 to i32
    %c0_i32_0 = arith.constant 0 : i32
    %2 = arith.cmpi ne, %1, %c0_i32_0 : i32
    scf.if %2 {
      %cst_9 = arith.constant 0.000000e+00 : f32
      %15 = vector.broadcast %cst_9 : f32 to vector<128x128xf32>
      %c0_10 = arith.constant 0 : index
      %c0_11 = arith.constant 0 : index
      %16 = vector.load %arg5[%c0_10, %c0_11] : memref<128x128xf32, #tpu.memory_space<vmem>>, vector<128x128xf32>
      tpu.vector_store %arg5[%c0_10, %c0_11], %15 {strides = array<i32>} : memref<128x128xf32, #tpu.memory_space<vmem>>, vector<128x128xf32>,
    } else {
    }
    %c128_i32 = arith.constant 128 : i32
    %3 = arith.muli %arg1, %c128_i32 : i32
    %4 = tpu.assume_multiple %3, 128 : i32
    %5 = arith.index_cast %4 : i32 to index
    %c0 = arith.constant 0 : index
    %6 = vector.load %arg3[%5, %c0] : memref<128x128xf32, #tpu.memory_space<vmem>>, vector<128x128xf32>
    %c0_1 = arith.constant 0 : index
    %c0_2 = arith.constant 0 : index
    %7 = vector.load %arg5[%c0_1, %c0_2] : memref<128x128xf32, #tpu.memory_space<vmem>>, vector<128x128xf32>
    %c0_3 = arith.constant 0 : index
    %c0_4 = arith.constant 0 : index
    %8 = vector.load %arg2[%c0_3, %c0_4] : memref<128x128xf32, #tpu.memory_space<vmem>>, vector<128x128xf32>
    %cst = arith.constant dense<0.000000e+00> : vector<128x128xf32>
    %9 = tpu.matmul %8, %6, %cst {dimension_numbers = #tpu.dot_dimension_numbers<[1], [0], [0], [1], [0, 0, 1, 1], [], []>} : vector<128x128xf32>, vector<128x128xf32>, vector<128x128xf32> -> vector<128x128xf32>
    %10 = arith.addf %7, %9 : vector<128x128xf32>
    %c0_5 = arith.constant 0 : index
    %c0_6 = arith.constant 0 : index
    %11 = vector.load %arg5[%c0_5, %c0_6] : memref<128x128xf32, #tpu.memory_space<vmem>>, vector<128x128xf32>
    tpu.vector_store %arg5[%c0_5, %c0_6], %10 {strides = array<i32>} : memref<128x128xf32, #tpu.memory_space<vmem>>, vector<128x128xf32>,
    %c0_i32_7 = arith.constant 0 : i32
    %12 = arith.cmpi eq, %arg1, %c0_i32_7 : i32
    %13 = arith.extui %12 : i1 to i32
    %c0_i32_8 = arith.constant 0 : i32
    %14 = arith.cmpi ne, %13, %c0_i32_8 : i32
    scf.if %14 {
      %c0_9 = arith.constant 0 : index
      %c0_10 = arith.constant 0 : index
      %15 = vector.load %arg4[%c0_9, %c0_10] : memref<128x128xf32, #tpu.memory_space<vmem>>, vector<128x128xf32>
      %c0_11 = arith.constant 0 : index
      %c0_12 = arith.constant 0 : index
      %16 = vector.load %arg5[%c0_11, %c0_12] : memref<128x128xf32, #tpu.memory_space<vmem>>, vector<128x128xf32>
      %17 = arith.addf %15, %16 : vector<128x128xf32>
      %c0_13 = arith.constant 0 : index
      %c0_14 = arith.constant 0 : index
      %18 = vector.load %arg6[%c0_13, %c0_14] : memref<128x128xf32, #tpu.memory_space<vmem>>, vector<128x128xf32>
      tpu.vector_store %arg6[%c0_13, %c0_14], %17 {strides = array<i32>} : memref<128x128xf32, #tpu.memory_space<vmem>>, vector<128x128xf32>,
    } else {
    }
    return
  }
  func.func @transform_0(%arg0: i32, %arg1: i32) -> (i32, i32) {
    %c0_i32 = arith.constant 0 : i32
    return %arg0, %arg1 : i32, i32
  }
  func.func @transform_1(%arg0: i32, %arg1: i32) -> (i32, i32) {
    %c0_i32 = arith.constant 0 : i32
    %c0_i32_0 = arith.constant 0 : i32
    %c0_i32_1 = arith.constant 0 : i32
    return %c0_i32, %c0_i32_0 : i32, i32
  }
  func.func @transform_2(%arg0: i32, %arg1: i32) -> (i32, i32) {
    %c0_i32 = arith.constant 0 : i32
    %c0_i32_0 = arith.constant 0 : i32
    return %arg0, %c0_i32 : i32, i32
  }
  func.func @transform_3(%arg0: i32, %arg1: i32) -> (i32, i32) {
    %c0_i32 = arith.constant 0 : i32
    %c0_i32_0 = arith.constant 0 : i32
    return %arg0, %c0_i32 : i32, i32
  }
  func.func @transform_4(%arg0: i32, %arg1: i32) -> (i32, i32) {
    %c0_i32 = arith.constant 0 : i32
    %c0_i32_0 = arith.constant 0 : i32
    return %arg0, %c0_i32 : i32, i32
  }
}

module attributes {stable_mosaic.version = 11 : i64} {
  func.func @_layer_kernel(%arg0: i32, %arg1: i32, %arg2: memref<128x128xf32, #tpu.memory_space<vmem>>, %arg3: memref<128x128xf32, #tpu.memory_space<vmem>>, %arg4: memref<128x128xf32, #tpu.memory_space<vmem>>, %arg5: memref<128x128xf32, #tpu.memory_space<vmem>>, %arg6: memref<128x128xf32, #tpu.memory_space<vmem>>) attributes {dimension_semantics = [#tpu.dimension_semantics<parallel>, #tpu.dimension_semantics<arbitrary>], iteration_bounds = array<i64: 1, 1>, scalar_prefetch = 0 : i64, scratch_operands = 0 : i64, tpu.core_type = #tpu.core_type<tc>, window_params = [{transform_indices = @transform_0, window_bounds = array<i64: 128, 128>}, {pipeline_mode = #tpu.pipeline_mode<synchronous>, transform_indices = @transform_1, window_bounds = array<i64: 128, 128>}, {transform_indices = @transform_2, window_bounds = array<i64: 128, 128>}, {transform_indices = @transform_3, window_bounds = array<i64: 128, 128>}, {transform_indices = @transform_4, window_bounds = array<i64: 128, 128>}]} {
    %c0_i32 = arith.constant 0 : i32
    %0 = arith.cmpi eq, %arg1, %c0_i32 : i32
    %1 = arith.extui %0 : i1 to i32
    %c0_i32_0 = arith.constant 0 : i32
    %2 = arith.cmpi ne, %1, %c0_i32_0 : i32
    scf.if %2 {
      %cst_9 = arith.constant 0.000000e+00 : f32
      %15 = vector.broadcast %cst_9 : f32 to vector<128x128xf32>
      %c0_10 = arith.constant 0 : index
      %c0_11 = arith.constant 0 : index
      %16 = vector.load %arg5[%c0_10, %c0_11] : memref<128x128xf32, #tpu.memory_space<vmem>>, vector<128x128xf32>
      tpu.vector_store %arg5[%c0_10, %c0_11], %15 {strides = array<i32>} : memref<128x128xf32, #tpu.memory_space<vmem>>, vector<128x128xf32>,
    } else {
    }
    %c128_i32 = arith.constant 128 : i32
    %3 = arith.muli %arg1, %c128_i32 : i32
    %4 = tpu.assume_multiple %3, 128 : i32
    %5 = arith.index_cast %4 : i32 to index
    %c0 = arith.constant 0 : index
    %6 = vector.load %arg3[%5, %c0] : memref<128x128xf32, #tpu.memory_space<vmem>>, vector<128x128xf32>
    %c0_1 = arith.constant 0 : index
    %c0_2 = arith.constant 0 : index
    %7 = vector.load %arg5[%c0_1, %c0_2] : memref<128x128xf32, #tpu.memory_space<vmem>>, vector<128x128xf32>
    %c0_3 = arith.constant 0 : index
    %c0_4 = arith.constant 0 : index
    %8 = vector.load %arg2[%c0_3, %c0_4] : memref<128x128xf32, #tpu.memory_space<vmem>>, vector<128x128xf32>
    %cst = arith.constant dense<0.000000e+00> : vector<128x128xf32>
    %9 = tpu.matmul %8, %6, %cst {dimension_numbers = #tpu.dot_dimension_numbers<[1], [0], [0], [1], [0, 0, 1, 1], [], []>} : vector<128x128xf32>, vector<128x128xf32>, vector<128x128xf32> -> vector<128x128xf32>
    %10 = arith.addf %7, %9 : vector<128x128xf32>
    %c0_5 = arith.constant 0 : index
    %c0_6 = arith.constant 0 : index
    %11 = vector.load %arg5[%c0_5, %c0_6] : memref<128x128xf32, #tpu.memory_space<vmem>>, vector<128x128xf32>
    tpu.vector_store %arg5[%c0_5, %c0_6], %10 {strides = array<i32>} : memref<128x128xf32, #tpu.memory_space<vmem>>, vector<128x128xf32>,
    %c0_i32_7 = arith.constant 0 : i32
    %12 = arith.cmpi eq, %arg1, %c0_i32_7 : i32
    %13 = arith.extui %12 : i1 to i32
    %c0_i32_8 = arith.constant 0 : i32
    %14 = arith.cmpi ne, %13, %c0_i32_8 : i32
    scf.if %14 {
      %c0_9 = arith.constant 0 : index
      %c0_10 = arith.constant 0 : index
      %15 = vector.load %arg4[%c0_9, %c0_10] : memref<128x128xf32, #tpu.memory_space<vmem>>, vector<128x128xf32>
      %c0_11 = arith.constant 0 : index
      %c0_12 = arith.constant 0 : index
      %16 = vector.load %arg5[%c0_11, %c0_12] : memref<128x128xf32, #tpu.memory_space<vmem>>, vector<128x128xf32>
      %17 = arith.addf %15, %16 : vector<128x128xf32>
      %c0_13 = arith.constant 0 : index
      %c0_14 = arith.constant 0 : index
      %18 = vector.load %arg6[%c0_13, %c0_14] : memref<128x128xf32, #tpu.memory_space<vmem>>, vector<128x128xf32>
      tpu.vector_store %arg6[%c0_13, %c0_14], %17 {strides = array<i32>} : memref<128x128xf32, #tpu.memory_space<vmem>>, vector<128x128xf32>,
    } else {
    }
    return
  }
  func.func @transform_0(%arg0: i32, %arg1: i32) -> (i32, i32) {
    %c0_i32 = arith.constant 0 : i32
    return %arg0, %arg1 : i32, i32
  }
  func.func @transform_1(%arg0: i32, %arg1: i32) -> (i32, i32) {
    %c0_i32 = arith.constant 0 : i32
    %c0_i32_0 = arith.constant 0 : i32
    %c0_i32_1 = arith.constant 0 : i32
    return %c0_i32, %c0_i32_0 : i32, i32
  }
  func.func @transform_2(%arg0: i32, %arg1: i32) -> (i32, i32) {
    %c0_i32 = arith.constant 0 : i32
    %c0_i32_0 = arith.constant 0 : i32
    return %arg0, %c0_i32 : i32, i32
  }
  func.func @transform_3(%arg0: i32, %arg1: i32) -> (i32, i32) {
    %c0_i32 = arith.constant 0 : i32
    %c0_i32_0 = arith.constant 0 : i32
    return %arg0, %c0_i32 : i32, i32
  }
  func.func @transform_4(%arg0: i32, %arg1: i32) -> (i32, i32) {
    %c0_i32 = arith.constant 0 : i32
    %c0_i32_0 = arith.constant 0 : i32
    return %arg0, %c0_i32 : i32, i32
  }
}

module attributes {stable_mosaic.version = 11 : i64} {
  func.func @_score_kernel(%arg0: i32, %arg1: memref<32x128xf32, #tpu.memory_space<vmem>>, %arg2: memref<32x128xf32, #tpu.memory_space<vmem>>, %arg3: memref<1x128xf32, #tpu.memory_space<vmem>>) attributes {dimension_semantics = [#tpu.dimension_semantics<parallel>], iteration_bounds = array<i64: 1>, scalar_prefetch = 0 : i64, scratch_operands = 0 : i64, tpu.core_type = #tpu.core_type<tc>, window_params = [{transform_indices = @transform_0, window_bounds = array<i64: 32, 128>}, {transform_indices = @transform_1, window_bounds = array<i64: 32, 128>}, {transform_indices = @transform_2, window_bounds = array<i64: 1, 128>}]} {
    %c0 = arith.constant 0 : index
    %c0_0 = arith.constant 0 : index
    %0 = vector.load %arg1[%c0, %c0_0] : memref<32x128xf32, #tpu.memory_space<vmem>>, vector<32x128xf32>
    %c0_1 = arith.constant 0 : index
    %c0_2 = arith.constant 0 : index
    %1 = vector.load %arg2[%c0_1, %c0_2] : memref<32x128xf32, #tpu.memory_space<vmem>>, vector<32x128xf32>
    %2 = arith.mulf %0, %1 : vector<32x128xf32>
    %cst = arith.constant dense<0.000000e+00> : vector<128xf32>
    %3 = vector.multi_reduction <add>, %2, %cst [0] : vector<32x128xf32> to vector<128xf32>
    %4 = vector.shape_cast %3 : vector<128xf32> to vector<1x128xf32>
    %5 = arith.negf %4 : vector<1x128xf32>
    %6 = math.exp %5 : vector<1x128xf32>
    %cst_3 = arith.constant 1.000000e+00 : f32
    %7 = vector.broadcast %cst_3 : f32 to vector<1x128xf32>
    %8 = arith.addf %7, %6 : vector<1x128xf32>
    %9 = arith.divf %7, %8 : vector<1x128xf32>
    %c0_4 = arith.constant 0 : index
    %c0_5 = arith.constant 0 : index
    %10 = vector.load %arg3[%c0_4, %c0_5] : memref<1x128xf32, #tpu.memory_space<vmem>>, vector<1x128xf32>
    tpu.vector_store %arg3[%c0_4, %c0_5], %9 {strides = array<i32>} : memref<1x128xf32, #tpu.memory_space<vmem>>, vector<1x128xf32>,
    return
  }
  func.func @transform_0(%arg0: i32) -> (i32, i32) {
    %c0_i32 = arith.constant 0 : i32
    %c0_i32_0 = arith.constant 0 : i32
    return %c0_i32, %arg0 : i32, i32
  }
  func.func @transform_1(%arg0: i32) -> (i32, i32) {
    %c0_i32 = arith.constant 0 : i32
    %c0_i32_0 = arith.constant 0 : i32
    return %c0_i32, %arg0 : i32, i32
  }
  func.func @transform_2(%arg0: i32) -> (i32, i32) {
    %c0_i32 = arith.constant 0 : i32
    %c0_i32_0 = arith.constant 0 : i32
    return %c0_i32, %arg0 : i32, i32
  }
}

</mosaic_0001>

<llo_original>
// kernel: _bpr_loss_impl.5
$region0: #{_bpr_loss_impl.5}
  #allocation0 [shape = 'u32[]', space=smem, size = 0x4, offset = 0x4, fixed_abs, tag = 'smem constant byte address 0x4 - core index']
  #allocation1 [shape = 'u32[72,128]{1,0:T(1,128)}', space=vmem, size = 0x9000, scoped, tag = 'internal scratch']
  %s0 = inlined_call_operand.vmem [shape: f32[128,128], index: 0, kind: input, shape index: {}]
  %s1 = inlined_call_operand.vmem [shape: f32[128,128], index: 1, kind: input, shape index: {}]
  %s2 = inlined_call_operand.vmem [shape: f32[128,128], index: 2, kind: input, shape index: {}, may-alias: {2,4}]
  %s3 = inlined_call_operand.vmem [shape: f32[128,128], index: 3, kind: output, shape index: {0}]
  %s4 = inlined_call_operand.vmem [shape: f32[128,128], index: 4, kind: output, shape index: {1}, may-alias: {2,4}]
  %5 = xla_tuple %s3, %s4
  %s6 = sld [smem:[#allocation0]]
  $region38: #{_bpr_loss_impl.5} parent=0
    _
  %s8 = ssub.s32 1, %s6
  %s9 = scalar_select 0, %s8, %s6
  // Predicated region
  $region2: #{_bpr_loss_impl.5} parent=0 // pred_check
    _
  $region3: #{_bpr_loss_impl.5} parent=0 // pred_check_branch
    %11 = sbr.rel (0) target = $region5
  $region4: #{_bpr_loss_impl.5} parent=0 // pred_region
    _
  $region5: #{_bpr_loss_impl.5} parent=0 // pred_fallthru
    _
  // Predicated region
  $region6: #{_bpr_loss_impl.5} parent=0 // pred_check
    _
  $region7: #{_bpr_loss_impl.5} parent=0 // pred_check_branch
    %13 = sbr.rel (0) target = $region9
  $region8: #{_bpr_loss_impl.5} parent=0 // pred_region
    _
  $region9: #{_bpr_loss_impl.5} parent=0 // pred_fallthru
    _
  // Predicated region
  $region10: #{_bpr_loss_impl.5} parent=0 // pred_check
    _
  $region11: #{_bpr_loss_impl.5} parent=0 // pred_check_branch
    %15 = sbr.rel (0) target = $region13
  $region12: #{_bpr_loss_impl.5} parent=0 // pred_region
    _
  $region13: #{_bpr_loss_impl.5} parent=0 // pred_fallthru
    _
  %p16 = scmp.eq.s32.totalorder 0, 0
  // Predicated region
  $region14: #{_bpr_loss_impl.5} parent=0 // pred_check
    %p17 = pneg %p16
  $region15: #{_bpr_loss_impl.5} parent=0 // pred_check_branch
    %19 = sbr.rel (%p17) target = $region17
  $region16: #{_bpr_loss_impl.5} parent=0 // pred_region
    %20 = vst [vmem:[%s3] sm:$0xff] 0.0
    %21 = vst [vmem:[%s3 + $0x8] sm:$0xff] 0.0
    %22 = vst [vmem:[%s3 + $0x10] sm:$0xff] 0.0
    %23 = vst [vmem:[%s3 + $0x18] sm:$0xff] 0.0
    %24 = vst [vmem:[%s3 + $0x20] sm:$0xff] 0.0
    %25 = vst [vmem:[%s3 + $0x28] sm:$0xff] 0.0
    %26 = vst [vmem:[%s3 + $0x30] sm:$0xff] 0.0
    %27 = vst [vmem:[%s3 + $0x38] sm:$0xff] 0.0
    %28 = vst [vmem:[%s3 + $0x40] sm:$0xff] 0.0
    %29 = vst [vmem:[%s3 + $0x48] sm:$0xff] 0.0
    %30 = vst [vmem:[%s3 + $0x50] sm:$0xff] 0.0
    %31 = vst [vmem:[%s3 + $0x58] sm:$0xff] 0.0
    %32 = vst [vmem:[%s3 + $0x60] sm:$0xff] 0.0
    %33 = vst [vmem:[%s3 + $0x68] sm:$0xff] 0.0
    %34 = vst [vmem:[%s3 + $0x70] sm:$0xff] 0.0
    %35 = vst [vmem:[%s3 + $0x78] sm:$0xff] 0.0
  $region17: #{_bpr_loss_impl.5} parent=0 // pred_fallthru
    _
  %s36 = smul.u32 0, 128
  %s37 = scalar_lea.vmem %s1, %s36
  %v38 = vld [vmem:[%s37] sm:$0xff]
  %v39 = vld [vmem:[%s37 + $0x8] sm:$0xff]
  %v40 = vld [vmem:[%s37 + $0x10] sm:$0xff]
  %v41 = vld [vmem:[%s37 + $0x18] sm:$0xff]
  %v42 = vld [vmem:[%s37 + $0x20] sm:$0xff]
  %v43 = vld [vmem:[%s37 + $0x28] sm:$0xff]
  %v44 = vld [vmem:[%s37 + $0x30] sm:$0xff]
  %v45 = vld [vmem:[%s37 + $0x38] sm:$0xff]
  %v46 = vld [vmem:[%s37 + $0x40] sm:$0xff]
  %v47 = vld [vmem:[%s37 + $0x48] sm:$0xff]
  %v48 = vld [vmem:[%s37 + $0x50] sm:$0xff]
  %v49 = vld [vmem:[%s37 + $0x58] sm:$0xff]
  %v50 = vld [vmem:[%s37 + $0x60] sm:$0xff]
  %v51 = vld [vmem:[%s37 + $0x68] sm:$0xff]
  %v52 = vld [vmem:[%s37 + $0x70] sm:$0xff]
  %v53 = vld [vmem:[%s37 + $0x78] sm:$0xff]
  %v54 = vld [vmem:[%s3] sm:$0xff]
  %v55 = vld [vmem:[%s3 + $0x8] sm:$0xff]
  %v56 = vld [vmem:[%s3 + $0x10] sm:$0xff]
  %v57 = vld [vmem:[%s3 + $0x18] sm:$0xff]
  %v58 = vld [vmem:[%s3 + $0x20] sm:$0xff]
  %v59 = vld [vmem:[%s3 + $0x28] sm:$0xff]
  %v60 = vld [vmem:[%s3 + $0x30] sm:$0xff]
  %v61 = vld [vmem:[%s3 + $0x38] sm:$0xff]
  %v62 = vld [vmem:[%s3 + $0x40] sm:$0xff]
  %v63 = vld [vmem:[%s3 + $0x48] sm:$0xff]
  %v64 = vld [vmem:[%s3 + $0x50] sm:$0xff]
  %v65 = vld [vmem:[%s3 + $0x58] sm:$0xff]
  %v66 = vld [vmem:[%s3 + $0x60] sm:$0xff]
  %v67 = vld [vmem:[%s3 + $0x68] sm:$0xff]
  %v68 = vld [vmem:[%s3 + $0x70] sm:$0xff]
  %v69 = vld [vmem:[%s3 + $0x78] sm:$0xff]
  %v70 = vld [vmem:[%s0] sm:$0xff]
  %v71 = vld [vmem:[%s0 + $0x8] sm:$0xff]
  %v72 = vld [vmem:[%s0 + $0x10] sm:$0xff]
  %v73 = vld [vmem:[%s0 + $0x18] sm:$0xff]
  %v74 = vld [vmem:[%s0 + $0x20] sm:$0xff]
  %v75 = vld [vmem:[%s0 + $0x28] sm:$0xff]
  %v76 = vld [vmem:[%s0 + $0x30] sm:$0xff]
  %v77 = vld [vmem:[%s0 + $0x38] sm:$0xff]
  %v78 = vld [vmem:[%s0 + $0x40] sm:$0xff]
  %v79 = vld [vmem:[%s0 + $0x48] sm:$0xff]
  %v80 = vld [vmem:[%s0 + $0x50] sm:$0xff]
  %v81 = vld [vmem:[%s0 + $0x58] sm:$0xff]
  %v82 = vld [vmem:[%s0 + $0x60] sm:$0xff]
  %v83 = vld [vmem:[%s0 + $0x68] sm:$0xff]
  %v84 = vld [vmem:[%s0 + $0x70] sm:$0xff]
  %v85 = vld [vmem:[%s0 + $0x78] sm:$0xff]
  %86 = vmatpush.msra.mxu0 %v53
  %87 = vmatpush.msra.mxu0 %v52
  %88 = vmatpush.msra.mxu0 %v51
  %89 = vmatpush.msra.mxu0 %v50
  %90 = vmatpush.msra.mxu0 %v49
  %91 = vmatpush.msra.mxu0 %v48
  %92 = vmatpush.msra.mxu0 %v47
  %93 = vmatpush.msra.mxu0 %v46
  %94 = vmatpush.msra.mxu0 %v45
  %95 = vmatpush.msra.mxu0 %v44
  %96 = vmatpush.msra.mxu0 %v43
  %97 = vmatpush.msra.mxu0 %v42
  %98 = vmatpush.msra.mxu0 %v41
  %99 = vmatpush.msra.mxu0 %v40
  %100 = vmatpush.msra.mxu0 %v39
  %101 = vmatpush.msra.mxu0 %v38
  %102 = vmatmul.f32.gmra.mxu0 %v70
  %v103 = vpop.f32.mrf.mxu0
  %v104 = vadd.f32 0.0, %v103
  %105 = vmatmul.f32.gmra.mxu0 %v71
  %v106 = vpop.f32.mrf.mxu0
  %v107 = vadd.f32 0.0, %v106
  %108 = vmatmul.f32.gmra.mxu0 %v72
  %v109 = vpop.f32.mrf.mxu0
  %v110 = vadd.f32 0.0, %v109
  %111 = vmatmul.f32.gmra.mxu0 %v73
  %v112 = vpop.f32.mrf.mxu0
  %v113 = vadd.f32 0.0, %v112
  %114 = vmatmul.f32.gmra.mxu0 %v74
  %v115 = vpop.f32.mrf.mxu0
  %v116 = vadd.f32 0.0, %v115
  %117 = vmatmul.f32.gmra.mxu0 %v75
  %v118 = vpop.f32.mrf.mxu0
  %v119 = vadd.f32 0.0, %v118
  %120 = vmatmul.f32.gmra.mxu0 %v76
  %v121 = vpop.f32.mrf.mxu0
  %v122 = vadd.f32 0.0, %v121
  %123 = vmatmul.f32.gmra.mxu0 %v77
  %v124 = vpop.f32.mrf.mxu0
  %v125 = vadd.f32 0.0, %v124
  %126 = vmatmul.f32.gmra.mxu0 %v78
  %v127 = vpop.f32.mrf.mxu0
  %v128 = vadd.f32 0.0, %v127
  %129 = vmatmul.f32.gmra.mxu0 %v79
  %v130 = vpop.f32.mrf.mxu0
  %v131 = vadd.f32 0.0, %v130
  %132 = vmatmul.f32.gmra.mxu0 %v80
  %v133 = vpop.f32.mrf.mxu0
  %v134 = vadd.f32 0.0, %v133
  %135 = vmatmul.f32.gmra.mxu0 %v81
  %v136 = vpop.f32.mrf.mxu0
  %v137 = vadd.f32 0.0, %v136
  %138 = vmatmul.f32.gmra.mxu0 %v82
  %v139 = vpop.f32.mrf.mxu0
  %v140 = vadd.f32 0.0, %v139
  %141 = vmatmul.f32.gmra.mxu0 %v83
  %v142 = vpop.f32.mrf.mxu0
  %v143 = vadd.f32 0.0, %v142
  %144 = vmatmul.f32.gmra.mxu0 %v84
  %v145 = vpop.f32.mrf.mxu0
  %v146 = vadd.f32 0.0, %v145
  %147 = vmatmul.f32.gmra.mxu0 %v85
  %v148 = vpop.f32.mrf.mxu0
  %v149 = vadd.f32 0.0, %v148
  %150 = vdwg.mxu0
  %v151 = vadd.f32 %v54, %v104
  %v152 = vadd.f32 %v55, %v107
  %v153 = vadd.f32 %v56, %v110
  %v154 = vadd.f32 %v57, %v113
  %v155 = vadd.f32 %v58, %v116
  %v156 = vadd.f32 %v59, %v119
  %v157 = vadd.f32 %v60, %v122
  %v158 = vadd.f32 %v61, %v125
  %v159 = vadd.f32 %v62, %v128
  %v160 = vadd.f32 %v63, %v131
  %v161 = vadd.f32 %v64, %v134
  %v162 = vadd.f32 %v65, %v137
  %v163 = vadd.f32 %v66, %v140
  %v164 = vadd.f32 %v67, %v143
  %v165 = vadd.f32 %v68, %v146
  %v166 = vadd.f32 %v69, %v149
  %167 = vst [vmem:[%s3] sm:$0xff] %v151
  %168 = vst [vmem:[%s3 + $0x8] sm:$0xff] %v152
  %169 = vst [vmem:[%s3 + $0x10] sm:$0xff] %v153
  %170 = vst [vmem:[%s3 + $0x18] sm:$0xff] %v154
  %171 = vst [vmem:[%s3 + $0x20] sm:$0xff] %v155
  %172 = vst [vmem:[%s3 + $0x28] sm:$0xff] %v156
  %173 = vst [vmem:[%s3 + $0x30] sm:$0xff] %v157
  %174 = vst [vmem:[%s3 + $0x38] sm:$0xff] %v158
  %175 = vst [vmem:[%s3 + $0x40] sm:$0xff] %v159
  %176 = vst [vmem:[%s3 + $0x48] sm:$0xff] %v160
  %177 = vst [vmem:[%s3 + $0x50] sm:$0xff] %v161
  %178 = vst [vmem:[%s3 + $0x58] sm:$0xff] %v162
  %179 = vst [vmem:[%s3 + $0x60] sm:$0xff] %v163
  %180 = vst [vmem:[%s3 + $0x68] sm:$0xff] %v164
  %181 = vst [vmem:[%s3 + $0x70] sm:$0xff] %v165
  %182 = vst [vmem:[%s3 + $0x78] sm:$0xff] %v166
  // Predicated region
  $region18: #{_bpr_loss_impl.5} parent=0 // pred_check
    %p183 = pneg %p16
  $region19: #{_bpr_loss_impl.5} parent=0 // pred_check_branch
    %185 = sbr.rel (%p183) target = $region21
  $region20: #{_bpr_loss_impl.5} parent=0 // pred_region
    %v186 = vld [vmem:[%s2] sm:$0xff]
    %v187 = vld [vmem:[%s2 + $0x8] sm:$0xff]
    %v188 = vld [vmem:[%s2 + $0x10] sm:$0xff]
    %v189 = vld [vmem:[%s2 + $0x18] sm:$0xff]
    %v190 = vld [vmem:[%s2 + $0x20] sm:$0xff]
    %v191 = vld [vmem:[%s2 + $0x28] sm:$0xff]
    %v192 = vld [vmem:[%s2 + $0x30] sm:$0xff]
    %v193 = vld [vmem:[%s2 + $0x38] sm:$0xff]
    %v194 = vld [vmem:[%s2 + $0x40] sm:$0xff]
    %v195 = vld [vmem:[%s2 + $0x48] sm:$0xff]
    %v196 = vld [vmem:[%s2 + $0x50] sm:$0xff]
    %v197 = vld [vmem:[%s2 + $0x58] sm:$0xff]
    %v198 = vld [vmem:[%s2 + $0x60] sm:$0xff]
    %v199 = vld [vmem:[%s2 + $0x68] sm:$0xff]
    %v200 = vld [vmem:[%s2 + $0x70] sm:$0xff]
    %v201 = vld [vmem:[%s2 + $0x78] sm:$0xff]
    %v202 = vld [vmem:[%s3] sm:$0xff]
    %v203 = vld [vmem:[%s3 + $0x8] sm:$0xff]
    %v204 = vld [vmem:[%s3 + $0x10] sm:$0xff]
    %v205 = vld [vmem:[%s3 + $0x18] sm:$0xff]
    %v206 = vld [vmem:[%s3 + $0x20] sm:$0xff]
    %v207 = vld [vmem:[%s3 + $0x28] sm:$0xff]
    %v208 = vld [vmem:[%s3 + $0x30] sm:$0xff]
    %v209 = vld [vmem:[%s3 + $0x38] sm:$0xff]
    %v210 = vld [vmem:[%s3 + $0x40] sm:$0xff]
    %v211 = vld [vmem:[%s3 + $0x48] sm:$0xff]
    %v212 = vld [vmem:[%s3 + $0x50] sm:$0xff]
    %v213 = vld [vmem:[%s3 + $0x58] sm:$0xff]
    %v214 = vld [vmem:[%s3 + $0x60] sm:$0xff]
    %v215 = vld [vmem:[%s3 + $0x68] sm:$0xff]
    %v216 = vld [vmem:[%s3 + $0x70] sm:$0xff]
    %v217 = vld [vmem:[%s3 + $0x78] sm:$0xff]
    %v218 = vadd.f32 %v186, %v202
    %v219 = vadd.f32 %v187, %v203
    %v220 = vadd.f32 %v188, %v204
    %v221 = vadd.f32 %v189, %v205
    %v222 = vadd.f32 %v190, %v206
    %v223 = vadd.f32 %v191, %v207
    %v224 = vadd.f32 %v192, %v208
    %v225 = vadd.f32 %v193, %v209
    %v226 = vadd.f32 %v194, %v210
    %v227 = vadd.f32 %v195, %v211
    %v228 = vadd.f32 %v196, %v212
    %v229 = vadd.f32 %v197, %v213
    %v230 = vadd.f32 %v198, %v214
    %v231 = vadd.f32 %v199, %v215
    %v232 = vadd.f32 %v200, %v216
    %v233 = vadd.f32 %v201, %v217
    %234 = vst [vmem:[%s4] sm:$0xff] %v218
    %235 = vst [vmem:[%s4 + $0x8] sm:$0xff] %v219
    %236 = vst [vmem:[%s4 + $0x10] sm:$0xff] %v220
    %237 = vst [vmem:[%s4 + $0x18] sm:$0xff] %v221
    %238 = vst [vmem:[%s4 + $0x20] sm:$0xff] %v222
    %239 = vst [vmem:[%s4 + $0x28] sm:$0xff] %v223
    %240 = vst [vmem:[%s4 + $0x30] sm:$0xff] %v224
    %241 = vst [vmem:[%s4 + $0x38] sm:$0xff] %v225
    %242 = vst [vmem:[%s4 + $0x40] sm:$0xff] %v226
    %243 = vst [vmem:[%s4 + $0x48] sm:$0xff] %v227
    %244 = vst [vmem:[%s4 + $0x50] sm:$0xff] %v228
    %245 = vst [vmem:[%s4 + $0x58] sm:$0xff] %v229
    %246 = vst [vmem:[%s4 + $0x60] sm:$0xff] %v230
    %247 = vst [vmem:[%s4 + $0x68] sm:$0xff] %v231
    %248 = vst [vmem:[%s4 + $0x70] sm:$0xff] %v232
    %249 = vst [vmem:[%s4 + $0x78] sm:$0xff] %v233
  $region21: #{_bpr_loss_impl.5} parent=0 // pred_fallthru
    _
  // Predicated region
  $region22: #{_bpr_loss_impl.5} parent=0 // pred_check
    _
  $region23: #{_bpr_loss_impl.5} parent=0 // pred_check_branch
    %251 = sbr.rel (0) target = $region25
  $region24: #{_bpr_loss_impl.5} parent=0 // pred_region
    _
  $region25: #{_bpr_loss_impl.5} parent=0 // pred_fallthru
    _
  // Predicated region
  $region26: #{_bpr_loss_impl.5} parent=0 // pred_check
    _
  $region27: #{_bpr_loss_impl.5} parent=0 // pred_check_branch
    %253 = sbr.rel (0) target = $region29
  $region28: #{_bpr_loss_impl.5} parent=0 // pred_region
    _
  $region29: #{_bpr_loss_impl.5} parent=0 // pred_fallthru
    _
  // Predicated region
  $region30: #{_bpr_loss_impl.5} parent=0 // pred_check
    _
  $region31: #{_bpr_loss_impl.5} parent=0 // pred_check_branch
    %255 = sbr.rel (0) target = $region33
  $region32: #{_bpr_loss_impl.5} parent=0 // pred_region
    _
  $region33: #{_bpr_loss_impl.5} parent=0 // pred_fallthru
    _
  // Predicated region
  $region34: #{_bpr_loss_impl.5} parent=0 // pred_check
    _
  $region35: #{_bpr_loss_impl.5} parent=0 // pred_check_branch
    %257 = sbr.rel (0) target = $region37
  $region36: #{_bpr_loss_impl.5} parent=0 // pred_region
    _
  $region37: #{_bpr_loss_impl.5} parent=0 // pred_fallthru
    _

// kernel: _bpr_loss_impl.7
$region0: #{_bpr_loss_impl.7}
  #allocation0 [shape = 'u32[]', space=smem, size = 0x4, offset = 0x4, fixed_abs, tag = 'smem constant byte address 0x4 - core index']
  #allocation1 [shape = 'u32[72,128]{1,0:T(1,128)}', space=vmem, size = 0x9000, scoped, tag = 'internal scratch']
  %s0 = inlined_call_operand.vmem [shape: f32[128,128], index: 0, kind: input, shape index: {}]
  %s1 = inlined_call_operand.vmem [shape: f32[128,128], index: 1, kind: input, shape index: {}]
  %s2 = inlined_call_operand.vmem [shape: f32[128,128], index: 2, kind: input, shape index: {}, may-alias: {2,4}]
  %s3 = inlined_call_operand.hbm [shape: f32[128,128], index: 3, kind: output, shape index: {0}]
  %s4 = inlined_call_operand.vmem [shape: f32[128,128], index: 4, kind: output, shape index: {1}, may-alias: {2,4}]
  %5 = xla_tuple %s3, %s4
  %s6 = sld [smem:[#allocation0]]
  $region38: #{_bpr_loss_impl.7} parent=0
    _
  %s8 = ssub.s32 1, %s6
  %s9 = scalar_select 0, %s8, %s6
  $region1: #{_bpr_loss_impl.7} parent=0
    #allocation2 [shape = 'u8[65536]{0}', space=vmem, size = 0x10000, scoped, tag = 'output window, operand 0, single buffered']
    #allocation3 [shape = 's32[1]{0}', space=sflag, size = 0x4, scoped, tag = 'scoped memory for _bpr_loss_impl.7']
    %10 = vsyncpa [#allocation3], 0
    // Predicated region
    $region2: #{_bpr_loss_impl.7} parent=1 // pred_check
      _
    $region3: #{_bpr_loss_impl.7} parent=1 // pred_check_branch
      %12 = sbr.rel (0) target = $region5
    $region4: #{_bpr_loss_impl.7} parent=1 // pred_region
      _
    $region5: #{_bpr_loss_impl.7} parent=1 // pred_fallthru
      _
    // Predicated region
    $region6: #{_bpr_loss_impl.7} parent=1 // pred_check
      _
    $region7: #{_bpr_loss_impl.7} parent=1 // pred_check_branch
      %14 = sbr.rel (0) target = $region9
    $region8: #{_bpr_loss_impl.7} parent=1 // pred_region
      _
    $region9: #{_bpr_loss_impl.7} parent=1 // pred_fallthru
      _
    // Predicated region
    $region10: #{_bpr_loss_impl.7} parent=1 // pred_check
      _
    $region11: #{_bpr_loss_impl.7} parent=1 // pred_check_branch
      %16 = sbr.rel (0) target = $region13
    $region12: #{_bpr_loss_impl.7} parent=1 // pred_region
      _
    $region13: #{_bpr_loss_impl.7} parent=1 // pred_fallthru
      _
    %p17 = scmp.eq.s32.totalorder 0, 0
    // Predicated region
    $region14: #{_bpr_loss_impl.7} parent=1 // pred_check
      %p18 = pneg %p17
    $region15: #{_bpr_loss_impl.7} parent=1 // pred_check_branch
      %20 = sbr.rel (%p18) target = $region17
    $region16: #{_bpr_loss_impl.7} parent=1 // pred_region
      %21 = vst [vmem:[#allocation2] sm:$0xff] 0.0
      %22 = vst [vmem:[#allocation2 + $0x8] sm:$0xff] 0.0
      %23 = vst [vmem:[#allocation2 + $0x10] sm:$0xff] 0.0
      %24 = vst [vmem:[#allocation2 + $0x18] sm:$0xff] 0.0
      %25 = vst [vmem:[#allocation2 + $0x20] sm:$0xff] 0.0
      %26 = vst [vmem:[#allocation2 + $0x28] sm:$0xff] 0.0
      %27 = vst [vmem:[#allocation2 + $0x30] sm:$0xff] 0.0
      %28 = vst [vmem:[#allocation2 + $0x38] sm:$0xff] 0.0
      %29 = vst [vmem:[#allocation2 + $0x40] sm:$0xff] 0.0
      %30 = vst [vmem:[#allocation2 + $0x48] sm:$0xff] 0.0
      %31 = vst [vmem:[#allocation2 + $0x50] sm:$0xff] 0.0
      %32 = vst [vmem:[#allocation2 + $0x58] sm:$0xff] 0.0
      %33 = vst [vmem:[#allocation2 + $0x60] sm:$0xff] 0.0
      %34 = vst [vmem:[#allocation2 + $0x68] sm:$0xff] 0.0
      %35 = vst [vmem:[#allocation2 + $0x70] sm:$0xff] 0.0
      %36 = vst [vmem:[#allocation2 + $0x78] sm:$0xff] 0.0
    $region17: #{_bpr_loss_impl.7} parent=1 // pred_fallthru
      _
    %s37 = smul.u32 0, 128
    %s38 = scalar_lea.vmem %s1, %s37
    %v39 = vld [vmem:[%s38] sm:$0xff]
    %v40 = vld [vmem:[%s38 + $0x8] sm:$0xff]
    %v41 = vld [vmem:[%s38 + $0x10] sm:$0xff]
    %v42 = vld [vmem:[%s38 + $0x18] sm:$0xff]
    %v43 = vld [vmem:[%s38 + $0x20] sm:$0xff]
    %v44 = vld [vmem:[%s38 + $0x28] sm:$0xff]
    %v45 = vld [vmem:[%s38 + $0x30] sm:$0xff]
    %v46 = vld [vmem:[%s38 + $0x38] sm:$0xff]
    %v47 = vld [vmem:[%s38 + $0x40] sm:$0xff]
    %v48 = vld [vmem:[%s38 + $0x48] sm:$0xff]
    %v49 = vld [vmem:[%s38 + $0x50] sm:$0xff]
    %v50 = vld [vmem:[%s38 + $0x58] sm:$0xff]
    %v51 = vld [vmem:[%s38 + $0x60] sm:$0xff]
    %v52 = vld [vmem:[%s38 + $0x68] sm:$0xff]
    %v53 = vld [vmem:[%s38 + $0x70] sm:$0xff]
    %v54 = vld [vmem:[%s38 + $0x78] sm:$0xff]
    %v55 = vld [vmem:[#allocation2] sm:$0xff]
    %v56 = vld [vmem:[#allocation2 + $0x8] sm:$0xff]
    %v57 = vld [vmem:[#allocation2 + $0x10] sm:$0xff]
    %v58 = vld [vmem:[#allocation2 + $0x18] sm:$0xff]
    %v59 = vld [vmem:[#allocation2 + $0x20] sm:$0xff]
    %v60 = vld [vmem:[#allocation2 + $0x28] sm:$0xff]
    %v61 = vld [vmem:[#allocation2 + $0x30] sm:$0xff]
    %v62 = vld [vmem:[#allocation2 + $0x38] sm:$0xff]
    %v63 = vld [vmem:[#allocation2 + $0x40] sm:$0xff]
    %v64 = vld [vmem:[#allocation2 + $0x48] sm:$0xff]
    %v65 = vld [vmem:[#allocation2 + $0x50] sm:$0xff]
    %v66 = vld [vmem:[#allocation2 + $0x58] sm:$0xff]
    %v67 = vld [vmem:[#allocation2 + $0x60] sm:$0xff]
    %v68 = vld [vmem:[#allocation2 + $0x68] sm:$0xff]
    %v69 = vld [vmem:[#allocation2 + $0x70] sm:$0xff]
    %v70 = vld [vmem:[#allocation2 + $0x78] sm:$0xff]
    %v71 = vld [vmem:[%s0] sm:$0xff]
    %v72 = vld [vmem:[%s0 + $0x8] sm:$0xff]
    %v73 = vld [vmem:[%s0 + $0x10] sm:$0xff]
    %v74 = vld [vmem:[%s0 + $0x18] sm:$0xff]
    %v75 = vld [vmem:[%s0 + $0x20] sm:$0xff]
    %v76 = vld [vmem:[%s0 + $0x28] sm:$0xff]
    %v77 = vld [vmem:[%s0 + $0x30] sm:$0xff]
    %v78 = vld [vmem:[%s0 + $0x38] sm:$0xff]
    %v79 = vld [vmem:[%s0 + $0x40] sm:$0xff]
    %v80 = vld [vmem:[%s0 + $0x48] sm:$0xff]
    %v81 = vld [vmem:[%s0 + $0x50] sm:$0xff]
    %v82 = vld [vmem:[%s0 + $0x58] sm:$0xff]
    %v83 = vld [vmem:[%s0 + $0x60] sm:$0xff]
    %v84 = vld [vmem:[%s0 + $0x68] sm:$0xff]
    %v85 = vld [vmem:[%s0 + $0x70] sm:$0xff]
    %v86 = vld [vmem:[%s0 + $0x78] sm:$0xff]
    %87 = vmatpush.msra.mxu0 %v54
    %88 = vmatpush.msra.mxu0 %v53
    %89 = vmatpush.msra.mxu0 %v52
    %90 = vmatpush.msra.mxu0 %v51
    %91 = vmatpush.msra.mxu0 %v50
    %92 = vmatpush.msra.mxu0 %v49
    %93 = vmatpush.msra.mxu0 %v48
    %94 = vmatpush.msra.mxu0 %v47
    %95 = vmatpush.msra.mxu0 %v46
    %96 = vmatpush.msra.mxu0 %v45
    %97 = vmatpush.msra.mxu0 %v44
    %98 = vmatpush.msra.mxu0 %v43
    %99 = vmatpush.msra.mxu0 %v42
    %100 = vmatpush.msra.mxu0 %v41
    %101 = vmatpush.msra.mxu0 %v40
    %102 = vmatpush.msra.mxu0 %v39
    %103 = vmatmul.f32.gmra.mxu0 %v71
    %v104 = vpop.f32.mrf.mxu0
    %v105 = vadd.f32 0.0, %v104
    %106 = vmatmul.f32.gmra.mxu0 %v72
    %v107 = vpop.f32.mrf.mxu0
    %v108 = vadd.f32 0.0, %v107
    %109 = vmatmul.f32.gmra.mxu0 %v73
    %v110 = vpop.f32.mrf.mxu0
    %v111 = vadd.f32 0.0, %v110
    %112 = vmatmul.f32.gmra.mxu0 %v74
    %v113 = vpop.f32.mrf.mxu0
    %v114 = vadd.f32 0.0, %v113
    %115 = vmatmul.f32.gmra.mxu0 %v75
    %v116 = vpop.f32.mrf.mxu0
    %v117 = vadd.f32 0.0, %v116
    %118 = vmatmul.f32.gmra.mxu0 %v76
    %v119 = vpop.f32.mrf.mxu0
    %v120 = vadd.f32 0.0, %v119
    %121 = vmatmul.f32.gmra.mxu0 %v77
    %v122 = vpop.f32.mrf.mxu0
    %v123 = vadd.f32 0.0, %v122
    %124 = vmatmul.f32.gmra.mxu0 %v78
    %v125 = vpop.f32.mrf.mxu0
    %v126 = vadd.f32 0.0, %v125
    %127 = vmatmul.f32.gmra.mxu0 %v79
    %v128 = vpop.f32.mrf.mxu0
    %v129 = vadd.f32 0.0, %v128
    %130 = vmatmul.f32.gmra.mxu0 %v80
    %v131 = vpop.f32.mrf.mxu0
    %v132 = vadd.f32 0.0, %v131
    %133 = vmatmul.f32.gmra.mxu0 %v81
    %v134 = vpop.f32.mrf.mxu0
    %v135 = vadd.f32 0.0, %v134
    %136 = vmatmul.f32.gmra.mxu0 %v82
    %v137 = vpop.f32.mrf.mxu0
    %v138 = vadd.f32 0.0, %v137
    %139 = vmatmul.f32.gmra.mxu0 %v83
    %v140 = vpop.f32.mrf.mxu0
    %v141 = vadd.f32 0.0, %v140
    %142 = vmatmul.f32.gmra.mxu0 %v84
    %v143 = vpop.f32.mrf.mxu0
    %v144 = vadd.f32 0.0, %v143
    %145 = vmatmul.f32.gmra.mxu0 %v85
    %v146 = vpop.f32.mrf.mxu0
    %v147 = vadd.f32 0.0, %v146
    %148 = vmatmul.f32.gmra.mxu0 %v86
    %v149 = vpop.f32.mrf.mxu0
    %v150 = vadd.f32 0.0, %v149
    %151 = vdwg.mxu0
    %v152 = vadd.f32 %v55, %v105
    %v153 = vadd.f32 %v56, %v108
    %v154 = vadd.f32 %v57, %v111
    %v155 = vadd.f32 %v58, %v114
    %v156 = vadd.f32 %v59, %v117
    %v157 = vadd.f32 %v60, %v120
    %v158 = vadd.f32 %v61, %v123
    %v159 = vadd.f32 %v62, %v126
    %v160 = vadd.f32 %v63, %v129
    %v161 = vadd.f32 %v64, %v132
    %v162 = vadd.f32 %v65, %v135
    %v163 = vadd.f32 %v66, %v138
    %v164 = vadd.f32 %v67, %v141
    %v165 = vadd.f32 %v68, %v144
    %v166 = vadd.f32 %v69, %v147
    %v167 = vadd.f32 %v70, %v150
    %168 = vst [vmem:[#allocation2] sm:$0xff] %v152
    %169 = vst [vmem:[#allocation2 + $0x8] sm:$0xff] %v153
    %170 = vst [vmem:[#allocation2 + $0x10] sm:$0xff] %v154
    %171 = vst [vmem:[#allocation2 + $0x18] sm:$0xff] %v155
    %172 = vst [vmem:[#allocation2 + $0x20] sm:$0xff] %v156
    %173 = vst [vmem:[#allocation2 + $0x28] sm:$0xff] %v157
    %174 = vst [vmem:[#allocation2 + $0x30] sm:$0xff] %v158
    %175 = vst [vmem:[#allocation2 + $0x38] sm:$0xff] %v159
    %176 = vst [vmem:[#allocation2 + $0x40] sm:$0xff] %v160
    %177 = vst [vmem:[#allocation2 + $0x48] sm:$0xff] %v161
    %178 = vst [vmem:[#allocation2 + $0x50] sm:$0xff] %v162
    %179 = vst [vmem:[#allocation2 + $0x58] sm:$0xff] %v163
    %180 = vst [vmem:[#allocation2 + $0x60] sm:$0xff] %v164
    %181 = vst [vmem:[#allocation2 + $0x68] sm:$0xff] %v165
    %182 = vst [vmem:[#allocation2 + $0x70] sm:$0xff] %v166
    %183 = vst [vmem:[#allocation2 + $0x78] sm:$0xff] %v167
    // Predicated region
    $region18: #{_bpr_loss_impl.7} parent=1 // pred_check
      %p184 = pneg %p17
    $region19: #{_bpr_loss_impl.7} parent=1 // pred_check_branch
      %186 = sbr.rel (%p184) target = $region21
    $region20: #{_bpr_loss_impl.7} parent=1 // pred_region
      %v187 = vld [vmem:[%s2] sm:$0xff]
      %v188 = vld [vmem:[%s2 + $0x8] sm:$0xff]
      %v189 = vld [vmem:[%s2 + $0x10] sm:$0xff]
      %v190 = vld [vmem:[%s2 + $0x18] sm:$0xff]
      %v191 = vld [vmem:[%s2 + $0x20] sm:$0xff]
      %v192 = vld [vmem:[%s2 + $0x28] sm:$0xff]
      %v193 = vld [vmem:[%s2 + $0x30] sm:$0xff]
      %v194 = vld [vmem:[%s2 + $0x38] sm:$0xff]
      %v195 = vld [vmem:[%s2 + $0x40] sm:$0xff]
      %v196 = vld [vmem:[%s2 + $0x48] sm:$0xff]
      %v197 = vld [vmem:[%s2 + $0x50] sm:$0xff]
      %v198 = vld [vmem:[%s2 + $0x58] sm:$0xff]
      %v199 = vld [vmem:[%s2 + $0x60] sm:$0xff]
      %v200 = vld [vmem:[%s2 + $0x68] sm:$0xff]
      %v201 = vld [vmem:[%s2 + $0x70] sm:$0xff]
      %v202 = vld [vmem:[%s2 + $0x78] sm:$0xff]
      %v203 = vld [vmem:[#allocation2] sm:$0xff]
      %v204 = vld [vmem:[#allocation2 + $0x8] sm:$0xff]
      %v205 = vld [vmem:[#allocation2 + $0x10] sm:$0xff]
      %v206 = vld [vmem:[#allocation2 + $0x18] sm:$0xff]
      %v207 = vld [vmem:[#allocation2 + $0x20] sm:$0xff]
      %v208 = vld [vmem:[#allocation2 + $0x28] sm:$0xff]
      %v209 = vld [vmem:[#allocation2 + $0x30] sm:$0xff]
      %v210 = vld [vmem:[#allocation2 + $0x38] sm:$0xff]
      %v211 = vld [vmem:[#allocation2 + $0x40] sm:$0xff]
      %v212 = vld [vmem:[#allocation2 + $0x48] sm:$0xff]
      %v213 = vld [vmem:[#allocation2 + $0x50] sm:$0xff]
      %v214 = vld [vmem:[#allocation2 + $0x58] sm:$0xff]
      %v215 = vld [vmem:[#allocation2 + $0x60] sm:$0xff]
      %v216 = vld [vmem:[#allocation2 + $0x68] sm:$0xff]
      %v217 = vld [vmem:[#allocation2 + $0x70] sm:$0xff]
      %v218 = vld [vmem:[#allocation2 + $0x78] sm:$0xff]
      %v219 = vadd.f32 %v187, %v203
      %v220 = vadd.f32 %v188, %v204
      %v221 = vadd.f32 %v189, %v205
      %v222 = vadd.f32 %v190, %v206
      %v223 = vadd.f32 %v191, %v207
      %v224 = vadd.f32 %v192, %v208
      %v225 = vadd.f32 %v193, %v209
      %v226 = vadd.f32 %v194, %v210
      %v227 = vadd.f32 %v195, %v211
      %v228 = vadd.f32 %v196, %v212
      %v229 = vadd.f32 %v197, %v213
      %v230 = vadd.f32 %v198, %v214
      %v231 = vadd.f32 %v199, %v215
      %v232 = vadd.f32 %v200, %v216
      %v233 = vadd.f32 %v201, %v217
      %v234 = vadd.f32 %v202, %v218
      %235 = vst [vmem:[%s4] sm:$0xff] %v219
      %236 = vst [vmem:[%s4 + $0x8] sm:$0xff] %v220
      %237 = vst [vmem:[%s4 + $0x10] sm:$0xff] %v221
      %238 = vst [vmem:[%s4 + $0x18] sm:$0xff] %v222
      %239 = vst [vmem:[%s4 + $0x20] sm:$0xff] %v223
      %240 = vst [vmem:[%s4 + $0x28] sm:$0xff] %v224
      %241 = vst [vmem:[%s4 + $0x30] sm:$0xff] %v225
      %242 = vst [vmem:[%s4 + $0x38] sm:$0xff] %v226
      %243 = vst [vmem:[%s4 + $0x40] sm:$0xff] %v227
      %244 = vst [vmem:[%s4 + $0x48] sm:$0xff] %v228
      %245 = vst [vmem:[%s4 + $0x50] sm:$0xff] %v229
      %246 = vst [vmem:[%s4 + $0x58] sm:$0xff] %v230
      %247 = vst [vmem:[%s4 + $0x60] sm:$0xff] %v231
      %248 = vst [vmem:[%s4 + $0x68] sm:$0xff] %v232
      %249 = vst [vmem:[%s4 + $0x70] sm:$0xff] %v233
      %250 = vst [vmem:[%s4 + $0x78] sm:$0xff] %v234
    $region21: #{_bpr_loss_impl.7} parent=1 // pred_fallthru
      _
    // Predicated region
    $region22: #{_bpr_loss_impl.7} parent=1 // pred_check
      _
    $region23: #{_bpr_loss_impl.7} parent=1 // pred_check_branch
      %252 = sbr.rel (0) target = $region25
    $region24: #{_bpr_loss_impl.7} parent=1 // pred_region
      %254 = vsyncadd [#allocation3], 0
      %s255 = sshll.u32 [#allocation2], 4
      %s256 = int_to_ptr.vmem [resolvable:$true] %s255
      %s257 = sshll.u32 %s3, 4
      %s258 = int_to_ptr.hbm [resolvable:$true] %s257
      %263 = dma.vmem_to_hbm [thread:$0]  %s256, 2048, %s258, [#allocation3], 128, 128, 8
    $region25: #{_bpr_loss_impl.7} parent=1 // pred_fallthru
      _
    // Predicated region
    $region26: #{_bpr_loss_impl.7} parent=1 // pred_check
      _
    $region27: #{_bpr_loss_impl.7} parent=1 // pred_check_branch
      %265 = sbr.rel (0) target = $region29
    $region28: #{_bpr_loss_impl.7} parent=1 // pred_region
      _
    $region29: #{_bpr_loss_impl.7} parent=1 // pred_fallthru
      _
    // Predicated region
    $region30: #{_bpr_loss_impl.7} parent=1 // pred_check
      _
    $region31: #{_bpr_loss_impl.7} parent=1 // pred_check_branch
      %267 = sbr.rel (0) target = $region33
    $region32: #{_bpr_loss_impl.7} parent=1 // pred_region
      %269 = dma.done [#allocation3], 2048
    $region33: #{_bpr_loss_impl.7} parent=1 // pred_fallthru
      _
    // Predicated region
    $region34: #{_bpr_loss_impl.7} parent=1 // pred_check
      _
    $region35: #{_bpr_loss_impl.7} parent=1 // pred_check_branch
      %271 = sbr.rel (0) target = $region37
    $region36: #{_bpr_loss_impl.7} parent=1 // pred_region
      _
    $region37: #{_bpr_loss_impl.7} parent=1 // pred_fallthru
      _
    %272 = vsyncpa [#allocation3], 1

// kernel: _bpr_loss_impl.8
$region0: #{_bpr_loss_impl.8}
  #allocation0 [shape = 'u32[]', space=smem, size = 0x4, offset = 0x4, fixed_abs, tag = 'smem constant byte address 0x4 - core index']
  #allocation1 [shape = 'u32[72,128]{1,0:T(1,128)}', space=vmem, size = 0x9000, scoped, tag = 'internal scratch']
  %s0 = inlined_call_operand.vmem [shape: f32[32,128], index: 0, kind: input, shape index: {}]
  %s1 = inlined_call_operand.vmem [shape: f32[32,128], index: 1, kind: input, shape index: {}]
  %s2 = inlined_call_operand.vmem [shape: f32[1,128], index: 2, kind: output, shape index: {}]
  %s3 = sld [smem:[#allocation0]]
  $region18: #{_bpr_loss_impl.8} parent=0
    _
  %s5 = ssub.s32 1, %s3
  %s6 = scalar_select 0, %s5, %s3
  // Predicated region
  $region2: #{_bpr_loss_impl.8} parent=0 // pred_check
    _
  $region3: #{_bpr_loss_impl.8} parent=0 // pred_check_branch
    %8 = sbr.rel (0) target = $region5
  $region4: #{_bpr_loss_impl.8} parent=0 // pred_region
    _
  $region5: #{_bpr_loss_impl.8} parent=0 // pred_fallthru
    _
  // Predicated region
  $region6: #{_bpr_loss_impl.8} parent=0 // pred_check
    _
  $region7: #{_bpr_loss_impl.8} parent=0 // pred_check_branch
    %10 = sbr.rel (0) target = $region9
  $region8: #{_bpr_loss_impl.8} parent=0 // pred_region
    _
  $region9: #{_bpr_loss_impl.8} parent=0 // pred_fallthru
    _
  %v11 = vld [vmem:[%s0] sm:$0xff]
  %v12 = vld [vmem:[%s0 + $0x8] sm:$0xff]
  %v13 = vld [vmem:[%s0 + $0x10] sm:$0xff]
  %v14 = vld [vmem:[%s0 + $0x18] sm:$0xff]
  %v15 = vld [vmem:[%s1] sm:$0xff]
  %v16 = vld [vmem:[%s1 + $0x8] sm:$0xff]
  %v17 = vld [vmem:[%s1 + $0x10] sm:$0xff]
  %v18 = vld [vmem:[%s1 + $0x18] sm:$0xff]
  %v19 = vmul.f32 %v11, %v15
  %v20 = vmul.f32 %v12, %v16
  %v21 = vmul.f32 %v13, %v17
  %v22 = vmul.f32 %v14, %v18
  %v23 = vadd.f32 %v19, %v20
  %v24 = vadd.f32 %v23, %v21
  %v25 = vadd.f32 %v24, %v22
  %v26 = vrot.slane %v25, 4
  %v27 = vadd.f32 %v25, %v26
  %v28 = vrot.slane %v27, 2
  %v29 = vadd.f32 %v27, %v28
  %v30 = vrot.slane %v29, 1
  %v31 = vadd.f32 %v29, %v30
  %v32 = vxor.u32 %v31, 2147483648
  %v33 = vmul.f32 %v32, 1.442695
  %v34 = vpow.pop %v33
  %v35 = vadd.f32 %v34, 1.0
  %v36 = vrcp.pop %v35
  %v37 = vmul.f32 %v35, %v36
  %v38 = vsub.f32 1.0, %v37
  %v39 = vmul.f32 %v36, %v38
  %v40 = vadd.f32 %v36, %v39
  %vm41 = vweird.f32 %v35
  %vm42 = vweird.f32 %v36
  %vm43 = vmor %vm41, %vm42
  %v44 = vsel %vm43, %v36, %v40
  %v45 = vand.u32 2147483647, %v35
  %vm46 = vcmp.eq.f32.partialorder %v45, 8.507059e+37
  %v47 = vand.u32 %v35, 2147483648
  %v48 = vor.u32 1.1754944e-38, %v47
  %v49 = vsel %vm46, %v48, %v44
  %v50 = vmul.f32 1.0, %v49
  %51 = vst [vmem:[%s2] sm:$0x1] %v50
  // Predicated region
  $region10: #{_bpr_loss_impl.8} parent=0 // pred_check
    _
  $region11: #{_bpr_loss_impl.8} parent=0 // pred_check_branch
    %53 = sbr.rel (0) target = $region13
  $region12: #{_bpr_loss_impl.8} parent=0 // pred_region
    _
  $region13: #{_bpr_loss_impl.8} parent=0 // pred_fallthru
    _
  // Predicated region
  $region14: #{_bpr_loss_impl.8} parent=0 // pred_check
    _
  $region15: #{_bpr_loss_impl.8} parent=0 // pred_check_branch
    %55 = sbr.rel (0) target = $region17
  $region16: #{_bpr_loss_impl.8} parent=0 // pred_region
    _
  $region17: #{_bpr_loss_impl.8} parent=0 // pred_fallthru
    _

</llo_original>
